<compile_context>
chip_gen: v5e
topology: v5e:2x2
jax: 0.10.0
libtpu: 0.0.40
codegen_flags: <defaults>
</compile_context>

<pallas_src>
import jax
import jax.numpy as jnp
from jax.experimental import pallas as pl
from jax.experimental.pallas import tpu as pltpu

_LANE = 128


def _round_up(x, m):
    return ((x + m - 1) // m) * m


def _soft_q_kernel(xt_ref, w1t_ref, b1_ref, w2t_ref, b2_ref, w3_ref, b3_ref,
                   out_ref):
    # xt_ref : [k1, tb]      f32   (state||action||pad, transposed, batch on lanes)
    # w1t_ref: [h_pad, k1]   bf16  (= W1^T, zero-padded)
    # b1_ref : [h_pad, 1]    f32
    # w2t_ref: [h_pad, h_pad] bf16 (= W2^T, zero-padded)
    # b2_ref : [h_pad, 1]    f32
    # w3_ref : [h_pad, 1]    f32
    # b3_ref : [1]           f32   (SMEM scalar)
    # out_ref: [1, tb]       f32   (lane-dense q row)

    # layer 1: single merged K=k1 MXU pass (state+action halves combined)
    x = xt_ref[...].astype(jnp.bfloat16)
    h1 = jnp.dot(w1t_ref[...], x, preferred_element_type=jnp.float32)
    h1 = jnp.maximum(h1 + b1_ref[...], 0.0)

    # layer 2 (bf16 MXU, f32 accumulate)
    h2 = jnp.dot(w2t_ref[...], h1.astype(jnp.bfloat16),
                 preferred_element_type=jnp.float32)
    h2 = jnp.maximum(h2 + b2_ref[...], 0.0)

    # layer 3 (out_features == 1): VPU multiply + cross-sublane reduce, f32.
    # Produces the q values directly as a lane-major [1, tb] row.
    q = jnp.sum(h2 * w3_ref[...], axis=0, keepdims=True) + b3_ref[0]
    out_ref[...] = q.astype(out_ref.dtype)


def _choose_batch_tile(batch, max_tile=512):
    """Lane-aligned batch tile: multiple of 128, <= max_tile, capped near
    ceil(batch/2) so the grid has >= 2 steps whenever the batch allows it
    (both v7x TensorCores get work). Never degenerates below 128."""
    half = -(-batch // 2)
    tb = -(-half // _LANE) * _LANE
    return int(max(_LANE, min(max_tile, tb)))


def soft_q_forward(state, action, params):
    """SoftQNetwork forward.

    state : [B, num_inputs]  f32
    action: [B, num_actions] f32
    params: output of prepare_params(...)
    returns: [B, 1] f32
    """
    B = state.shape[0]
    d_in = state.shape[1] + action.shape[1]
    h_pad, k1 = params["w1t"].shape

    tb = _choose_batch_tile(B)
    grid_b = pl.cdiv(B, tb)
    b_pad = grid_b * tb

    # concat + zero-pad + transpose: cheap XLA prologue on a tiny array; puts
    # the batch on the lane axis so the kernel output is lane-dense.
    x = jnp.concatenate([state, action], axis=1)
    x = jnp.pad(x, ((0, b_pad - B), (0, k1 - d_in)))
    xt = x.T                                                    # [k1, b_pad]

    def resident(arr):
        # full-array block + constant index_map -> stays VMEM-resident across steps
        return pl.BlockSpec(arr.shape, lambda i: (0, 0))

    # Advisory cost estimate for the surrounding XLA schedule.
    flops = 2 * b_pad * (k1 * h_pad + h_pad * h_pad + h_pad)
    param_bytes = sum(int(v.size) * v.dtype.itemsize
                      for name, v in params.items() if name != "b3")
    bytes_accessed = int(xt.size) * 4 + b_pad * 4 + param_bytes

    # VMEM budget: (double-buffered) resident weights/biases (lane-padded),
    # double-buffered io blocks, plus f32 activation temporaries + headroom.
    weight_vmem = 2 * (h_pad * max(k1, _LANE) * 2 + h_pad * h_pad * 2
                       + 3 * h_pad * _LANE * 4)
    io_vmem = 2 * (k1 * tb * 4 + tb * 4)
    act_vmem = 4 * h_pad * tb * 4
    vmem_limit = int(min(100 << 20,
                         max(32 << 20,
                             weight_vmem + io_vmem + act_vmem + (4 << 20))))

    out_padded = pl.pallas_call(
        _soft_q_kernel,
        out_shape=jax.ShapeDtypeStruct((grid_b, 1, tb), jnp.float32),
        grid=(grid_b,),
        in_specs=[
            pl.BlockSpec((k1, tb), lambda i: (0, i)),            # x^T batch tile
            resident(params["w1t"]),
            resident(params["b1"]),
            resident(params["w2t"]),
            resident(params["b2"]),
            resident(params["w3"]),
            pl.BlockSpec(memory_space=pltpu.MemorySpace.SMEM),    # b3 scalar
        ],
        out_specs=pl.BlockSpec((None, 1, tb), lambda i: (i, 0, 0)),
        compiler_params=pltpu.CompilerParams(
            dimension_semantics=("parallel",),
            vmem_limit_bytes=vmem_limit),
        cost_estimate=pl.CostEstimate(flops=flops, transcendentals=0,
                                      bytes_accessed=bytes_accessed),
    )(xt, params["w1t"], params["b1"], params["w2t"], params["b2"],
      params["w3"], params["b3"])

    # (grid_b, 1, tb) -> (b_pad, 1) in batch order, drop the padded rows.
    return out_padded.reshape(b_pad, 1)[:B]


def init_params(key, num_inputs, num_actions, hidden_size, init_w=0.003):
    """PyTorch-equivalent init (uniform(-1/sqrt(fan_in), 1/sqrt(fan_in)),
    uniform(-init_w, init_w) for linear3). Weights stored as [in, out], f32."""
    d_in = num_inputs + num_actions
    k = jax.random.split(key, 6)

    def u(key, shape, bound):
        return jax.random.uniform(key, shape, jnp.float32, -bound, bound)

    b1 = 1.0 / float(d_in) ** 0.5
    b2 = 1.0 / float(hidden_size) ** 0.5
    return {
        "w1": u(k[0], (d_in, hidden_size), b1),
        "b1": u(k[1], (1, hidden_size), b1),
        "w2": u(k[2], (hidden_size, hidden_size), b2),
        "b2": u(k[3], (1, hidden_size), b2),
        "w3": u(k[4], (hidden_size, 1), init_w),
        "b3": u(k[5], (1, 1), init_w),
    }


def prepare_params(raw):
    """One-time kernel-friendly parameter prep for the lane-major (batch on
    lanes) layout: transpose the weights, zero-pad the hidden dim to a multiple
    of 128 and the layer-1 contraction dim to a multiple of 8, cast layer-1/2
    weights to bf16. Zero padding is exact (ReLU(0)=0, zero rows/cols)."""
    d_in, h = raw["w1"].shape
    h_pad = _round_up(max(h, _LANE), _LANE)
    k1 = _round_up(max(d_in, 8), 8)

    w1 = jnp.pad(raw["w1"], ((0, k1 - d_in), (0, h_pad - h)))    # [k1, h_pad]
    w2 = jnp.pad(raw["w2"], ((0, h_pad - h), (0, h_pad - h)))    # [h_pad, h_pad]
    return {
        "w1t": w1.T.astype(jnp.bfloat16),                         # [h_pad, k1]
        "b1": jnp.pad(raw["b1"], ((0, 0), (0, h_pad - h))).T,     # [h_pad, 1] f32
        "w2t": w2.T.astype(jnp.bfloat16),                         # [h_pad, h_pad]
        "b2": jnp.pad(raw["b2"], ((0, 0), (0, h_pad - h))).T,     # [h_pad, 1] f32
        "w3": jnp.pad(raw["w3"], ((0, h_pad - h), (0, 0))),       # [h_pad, 1] f32
        "b3": raw["b3"].reshape(1),                               # [1] f32 (SMEM)
    }


def _reference(state, action, raw):
    x = jnp.concatenate([state, action], axis=1)
    h1 = jnp.maximum(x @ raw["w1"] + raw["b1"], 0.0)
    h2 = jnp.maximum(h1 @ raw["w2"] + raw["b2"], 0.0)
    return h2 @ raw["w3"] + raw["b3"]


if __name__ == "__main__":
    # Small shapes consistent with a point-mass SAC critic.
    batch = 8
    num_inputs = 4      # state dim
    num_actions = 2     # action dim
    hidden_size = 32

    key = jax.random.PRNGKey(0)
    k_s, k_a, k_p = jax.random.split(key, 3)
    state = jax.random.normal(k_s, (batch, num_inputs), jnp.float32)
    action = jax.random.normal(k_a, (batch, num_actions), jnp.float32)
    raw = init_params(k_p, num_inputs, num_actions, hidden_size)
    params = prepare_params(raw)

    q = soft_q_forward(state, action, params)
    q = jax.block_until_ready(q)

    q_ref = _reference(state, action, raw)
    assert q.shape == (batch, 1), q.shape
    # layers 1/2 run in bf16 on the MXU -> compare against the f32 reference
    # with a correspondingly loose tolerance.
    assert jnp.allclose(q, q_ref, atol=5e-3, rtol=5e-2), (q, q_ref)

    print("KERNEL_OK")
</pallas_src>

<mosaic_0001>
module attributes {stable_mosaic.version = 11 : i64} {
  func.func @_soft_q_kernel(%arg0: i32, %arg1: memref<8x128xf32, #tpu.memory_space<vmem>>, %arg2: memref<128x8xbf16, #tpu.memory_space<vmem>>, %arg3: memref<128x1xf32, #tpu.memory_space<vmem>>, %arg4: memref<128x128xbf16, #tpu.memory_space<vmem>>, %arg5: memref<128x1xf32, #tpu.memory_space<vmem>>, %arg6: memref<128x1xf32, #tpu.memory_space<vmem>>, %arg7: memref<1xf32, #tpu.memory_space<smem>>, %arg8: memref<1x1x128xf32, #tpu.memory_space<vmem>>) attributes {dimension_semantics = [#tpu.dimension_semantics<parallel>], iteration_bounds = array<i64: 1>, scalar_prefetch = 0 : i64, scratch_operands = 0 : i64, tpu.core_type = #tpu.core_type<tc>, window_params = [{transform_indices = @transform_0, window_bounds = array<i64: 8, 128>}, {pipeline_mode = #tpu.pipeline_mode<synchronous>, transform_indices = @transform_1, window_bounds = array<i64: 128, 8>}, {pipeline_mode = #tpu.pipeline_mode<synchronous>, transform_indices = @transform_2, window_bounds = array<i64: 128, 1>}, {pipeline_mode = #tpu.pipeline_mode<synchronous>, transform_indices = @transform_3, window_bounds = array<i64: 128, 128>}, {pipeline_mode = #tpu.pipeline_mode<synchronous>, transform_indices = @transform_4, window_bounds = array<i64: 128, 1>}, {pipeline_mode = #tpu.pipeline_mode<synchronous>, transform_indices = @transform_5, window_bounds = array<i64: 128, 1>}, {transform_indices = @transform_6, window_bounds = array<i64: 1>}, {transform_indices = @transform_7, window_bounds = array<i64: 1, 1, 128>}]} {
    %c0 = arith.constant 0 : index
    %c0_0 = arith.constant 0 : index
    %0 = vector.load %arg1[%c0, %c0_0] : memref<8x128xf32, #tpu.memory_space<vmem>>, vector<8x128xf32>
    %1 = arith.truncf %0 : vector<8x128xf32> to vector<8x128xbf16>
    %c0_1 = arith.constant 0 : index
    %c0_2 = arith.constant 0 : index
    %2 = vector.load %arg2[%c0_1, %c0_2] : memref<128x8xbf16, #tpu.memory_space<vmem>>, vector<128x8xbf16>
    %cst = arith.constant dense<0.000000e+00> : vector<128x128xf32>
    %3 = tpu.matmul %2, %1, %cst {dimension_numbers = #tpu.dot_dimension_numbers<[1], [0], [0], [1], [0, 0, 1, 1], [], []>} : vector<128x8xbf16>, vector<8x128xbf16>, vector<128x128xf32> -> vector<128x128xf32>
    %c0_3 = arith.constant 0 : index
    %c0_4 = arith.constant 0 : index
    %4 = vector.load %arg3[%c0_3, %c0_4] : memref<128x1xf32, #tpu.memory_space<vmem>>, vector<128x1xf32>
    %5 = vector.broadcast %4 : vector<128x1xf32> to vector<128x128xf32>
    %6 = arith.addf %3, %5 : vector<128x128xf32>
    %cst_5 = arith.constant 0.000000e+00 : f32
    %7 = vector.broadcast %cst_5 : f32 to vector<128x128xf32>
    %8 = arith.maximumf %6, %7 : vector<128x128xf32>
    %c0_6 = arith.constant 0 : index
    %c0_7 = arith.constant 0 : index
    %9 = vector.load %arg4[%c0_6, %c0_7] : memref<128x128xbf16, #tpu.memory_space<vmem>>, vector<128x128xbf16>
    %10 = arith.truncf %8 : vector<128x128xf32> to vector<128x128xbf16>
    %cst_8 = arith.constant dense<0.000000e+00> : vector<128x128xf32>
    %11 = tpu.matmul %9, %10, %cst_8 {dimension_numbers = #tpu.dot_dimension_numbers<[1], [0], [0], [1], [0, 0, 1, 1], [], []>} : vector<128x128xbf16>, vector<128x128xbf16>, vector<128x128xf32> -> vector<128x128xf32>
    %c0_9 = arith.constant 0 : index
    %c0_10 = arith.constant 0 : index
    %12 = vector.load %arg5[%c0_9, %c0_10] : memref<128x1xf32, #tpu.memory_space<vmem>>, vector<128x1xf32>
    %13 = vector.broadcast %12 : vector<128x1xf32> to vector<128x128xf32>
    %14 = arith.addf %11, %13 : vector<128x128xf32>
    %cst_11 = arith.constant 0.000000e+00 : f32
    %15 = vector.broadcast %cst_11 : f32 to vector<128x128xf32>
    %16 = arith.maximumf %14, %15 : vector<128x128xf32>
    %c0_12 = arith.constant 0 : index
    %c0_13 = arith.constant 0 : index
    %17 = vector.load %arg6[%c0_12, %c0_13] : memref<128x1xf32, #tpu.memory_space<vmem>>, vector<128x1xf32>
    %18 = vector.broadcast %17 : vector<128x1xf32> to vector<128x128xf32>
    %19 = arith.mulf %16, %18 : vector<128x128xf32>
    %cst_14 = arith.constant dense<0.000000e+00> : vector<128xf32>
    %20 = vector.multi_reduction <add>, %19, %cst_14 [0] : vector<128x128xf32> to vector<128xf32>
    %21 = vector.shape_cast %20 : vector<128xf32> to vector<1x128xf32>
    %c0_15 = arith.constant 0 : index
    %22 = memref.load %arg7[%c0_15] : memref<1xf32, #tpu.memory_space<smem>>
    %23 = vector.broadcast %22 : f32 to vector<1x128xf32>
    %24 = arith.addf %21, %23 : vector<1x128xf32>
    %c0_16 = arith.constant 0 : index
    %c0_17 = arith.constant 0 : index
    %c0_18 = arith.constant 0 : index
    %25 = vector.load %arg8[%c0_16, %c0_17, %c0_18] : memref<1x1x128xf32, #tpu.memory_space<vmem>>, vector<1x1x128xf32>
    %26 = vector.shape_cast %25 : vector<1x1x128xf32> to vector<1x128xf32>
    %27 = vector.shape_cast %24 : vector<1x128xf32> to vector<1x1x128xf32>
    tpu.vector_store %arg8[%c0_16, %c0_17, %c0_18], %27 {strides = array<i32>} : memref<1x1x128xf32, #tpu.memory_space<vmem>>, vector<1x1x128xf32>,
    return
  }
  func.func @transform_0(%arg0: i32) -> (i32, i32) {
    %c0_i32 = arith.constant 0 : i32
    %c0_i32_0 = arith.constant 0 : i32
    return %c0_i32, %arg0 : i32, i32
  }
  func.func @transform_1(%arg0: i32) -> (i32, i32) {
    %c0_i32 = arith.constant 0 : i32
    %c0_i32_0 = arith.constant 0 : i32
    %c0_i32_1 = arith.constant 0 : i32
    return %c0_i32, %c0_i32_0 : i32, i32
  }
  func.func @transform_2(%arg0: i32) -> (i32, i32) {
    %c0_i32 = arith.constant 0 : i32
    %c0_i32_0 = arith.constant 0 : i32
    %c0_i32_1 = arith.constant 0 : i32
    return %c0_i32, %c0_i32_0 : i32, i32
  }
  func.func @transform_3(%arg0: i32) -> (i32, i32) {
    %c0_i32 = arith.constant 0 : i32
    %c0_i32_0 = arith.constant 0 : i32
    %c0_i32_1 = arith.constant 0 : i32
    return %c0_i32, %c0_i32_0 : i32, i32
  }
  func.func @transform_4(%arg0: i32) -> (i32, i32) {
    %c0_i32 = arith.constant 0 : i32
    %c0_i32_0 = arith.constant 0 : i32
    %c0_i32_1 = arith.constant 0 : i32
    return %c0_i32, %c0_i32_0 : i32, i32
  }
  func.func @transform_5(%arg0: i32) -> (i32, i32) {
    %c0_i32 = arith.constant 0 : i32
    %c0_i32_0 = arith.constant 0 : i32
    %c0_i32_1 = arith.constant 0 : i32
    return %c0_i32, %c0_i32_0 : i32, i32
  }
  func.func @transform_6(%arg0: i32) -> i32 {
    %c0_i32 = arith.constant 0 : i32
    %c0_i32_0 = arith.constant 0 : i32
    return %c0_i32 : i32
  }
  func.func @transform_7(%arg0: i32) -> (i32, i32, i32) {
    %c0_i32 = arith.constant 0 : i32
    %c0_i32_0 = arith.constant 0 : i32
    %c0_i32_1 = arith.constant 0 : i32
    return %arg0, %c0_i32, %c0_i32_0 : i32, i32, i32
  }
}

</mosaic_0001>

<llo_original>
// kernel: tpu_custom_call.1
$region0: #{tpu_custom_call.1}
  #allocation0 [shape = 'u32[]', space=smem, size = 0x4, offset = 0x4, fixed_abs, tag = 'smem constant byte address 0x4 - core index']
  #allocation1 [shape = 'u32[72,128]{1,0:T(1,128)}', space=vmem, size = 0x9000, scoped, tag = 'internal scratch']
  #allocation2 [shape = 'f32[1]{0:T(128)S(6)}', space=smem, size = 0x200, scoped, tag = 'scoped memory for tpu_custom_call.1']
  %s0 = inlined_call_operand.vmem [shape: f32[8,128], index: 0, kind: input, shape index: {}]
  %s1 = inlined_call_operand.vmem [shape: bf16[128,8], index: 1, kind: input, shape index: {}]
  %s2 = inlined_call_operand.vmem [shape: f32[128,1], index: 2, kind: input, shape index: {}]
  %s3 = inlined_call_operand.vmem [shape: bf16[128,128], index: 3, kind: input, shape index: {}]
  %s4 = inlined_call_operand.vmem [shape: f32[128,1], index: 4, kind: input, shape index: {}]
  %s5 = inlined_call_operand.vmem [shape: f32[128,1], index: 5, kind: input, shape index: {}]
  %s6 = inlined_call_operand.<no memory space> [shape: f32[1], index: 6, kind: input, shape index: {}]
  %s7 = inlined_call_operand.hbm [shape: f32[1,1,128], index: 7, kind: output, shape index: {}]
  %s8 = sld [smem:[#allocation0]]
  $region38: #{tpu_custom_call.1} parent=0
    _
  %s10 = ssub.s32 1, %s8
  %s11 = scalar_select 0, %s10, %s8
  %12 = sst [smem:[#allocation2]] %s6
  $region1: #{tpu_custom_call.1} parent=0
    #allocation3 [shape = 'u8[512]{0}', space=vmem, size = 0x400, scoped, tag = 'output window, operand 0, single buffered']
    #allocation4 [shape = 's32[1]{0}', space=sflag, size = 0x4, scoped, tag = 'scoped memory for tpu_custom_call.1']
    %13 = vsyncpa [#allocation4], 0
    // Predicated region
    $region2: #{tpu_custom_call.1} parent=1 // pred_check
      _
    $region3: #{tpu_custom_call.1} parent=1 // pred_check_branch
      %15 = sbr.rel (0) target = $region5
    $region4: #{tpu_custom_call.1} parent=1 // pred_region
      _
    $region5: #{tpu_custom_call.1} parent=1 // pred_fallthru
      _
    // Predicated region
    $region6: #{tpu_custom_call.1} parent=1 // pred_check
      _
    $region7: #{tpu_custom_call.1} parent=1 // pred_check_branch
      %17 = sbr.rel (0) target = $region9
    $region8: #{tpu_custom_call.1} parent=1 // pred_region
      _
    $region9: #{tpu_custom_call.1} parent=1 // pred_fallthru
      _
    // Predicated region
    $region10: #{tpu_custom_call.1} parent=1 // pred_check
      _
    $region11: #{tpu_custom_call.1} parent=1 // pred_check_branch
      %19 = sbr.rel (0) target = $region13
    $region12: #{tpu_custom_call.1} parent=1 // pred_region
      _
    $region13: #{tpu_custom_call.1} parent=1 // pred_fallthru
      _
    // Predicated region
    $region14: #{tpu_custom_call.1} parent=1 // pred_check
      _
    $region15: #{tpu_custom_call.1} parent=1 // pred_check_branch
      %21 = sbr.rel (0) target = $region17
    $region16: #{tpu_custom_call.1} parent=1 // pred_region
      _
    $region17: #{tpu_custom_call.1} parent=1 // pred_fallthru
      _
    // Predicated region
    $region18: #{tpu_custom_call.1} parent=1 // pred_check
      _
    $region19: #{tpu_custom_call.1} parent=1 // pred_check_branch
      %23 = sbr.rel (0) target = $region21
    $region20: #{tpu_custom_call.1} parent=1 // pred_region
      _
    $region21: #{tpu_custom_call.1} parent=1 // pred_fallthru
      _
    // Predicated region
    $region22: #{tpu_custom_call.1} parent=1 // pred_check
      _
    $region23: #{tpu_custom_call.1} parent=1 // pred_check_branch
      %25 = sbr.rel (0) target = $region25
    $region24: #{tpu_custom_call.1} parent=1 // pred_region
      _
    $region25: #{tpu_custom_call.1} parent=1 // pred_fallthru
      _
    // Predicated region
    $region26: #{tpu_custom_call.1} parent=1 // pred_check
      _
    $region27: #{tpu_custom_call.1} parent=1 // pred_check_branch
      %27 = sbr.rel (0) target = $region29
    $region28: #{tpu_custom_call.1} parent=1 // pred_region
      _
    $region29: #{tpu_custom_call.1} parent=1 // pred_fallthru
      _
    %v29 = vld [vmem:[%s0] sm:$0xff]
    %v30 = vpack.c.bf16 %v29, %v29
    %v31 = vld [vmem:[%s1] sm:$0xf]
    %v32 = vld [vmem:[%s1 + $0x4] sm:$0xf]
    %v33 = vld [vmem:[%s1 + $0x8] sm:$0xf]
    %v34 = vld [vmem:[%s1 + $0xc] sm:$0xf]
    %v35 = vld [vmem:[%s1 + $0x10] sm:$0xf]
    %v36 = vld [vmem:[%s1 + $0x14] sm:$0xf]
    %v37 = vld [vmem:[%s1 + $0x18] sm:$0xf]
    %v38 = vld [vmem:[%s1 + $0x1c] sm:$0xf]
    %v39 = vld [vmem:[%s1 + $0x20] sm:$0xf]
    %v40 = vld [vmem:[%s1 + $0x24] sm:$0xf]
    %v41 = vld [vmem:[%s1 + $0x28] sm:$0xf]
    %v42 = vld [vmem:[%s1 + $0x2c] sm:$0xf]
    %v43 = vld [vmem:[%s1 + $0x30] sm:$0xf]
    %v44 = vld [vmem:[%s1 + $0x34] sm:$0xf]
    %v45 = vld [vmem:[%s1 + $0x38] sm:$0xf]
    %v46 = vld [vmem:[%s1 + $0x3c] sm:$0xf]
    %v47 = vld [vmem:[%s2] sm:$0xff]
    %v48 = vld [vmem:[%s2 + $0x8] sm:$0xff]
    %v49 = vld [vmem:[%s2 + $0x10] sm:$0xff]
    %v50 = vld [vmem:[%s2 + $0x18] sm:$0xff]
    %v51 = vld [vmem:[%s2 + $0x20] sm:$0xff]
    %v52 = vld [vmem:[%s2 + $0x28] sm:$0xff]
    %v53 = vld [vmem:[%s2 + $0x30] sm:$0xff]
    %v54 = vld [vmem:[%s2 + $0x38] sm:$0xff]
    %v55 = vld [vmem:[%s2 + $0x40] sm:$0xff]
    %v56 = vld [vmem:[%s2 + $0x48] sm:$0xff]
    %v57 = vld [vmem:[%s2 + $0x50] sm:$0xff]
    %v58 = vld [vmem:[%s2 + $0x58] sm:$0xff]
    %v59 = vld [vmem:[%s2 + $0x60] sm:$0xff]
    %v60 = vld [vmem:[%s2 + $0x68] sm:$0xff]
    %v61 = vld [vmem:[%s2 + $0x70] sm:$0xff]
    %v62 = vld [vmem:[%s2 + $0x78] sm:$0xff]
    %64 = vset.pattern.permute.xlu0 0
    %65 = vperm.xlu0 %64, %v47
    %v66 = vpop.permute.xlu0 %65
    %69 = vset.pattern.permute.xlu0 0
    %70 = vperm.xlu0 %69, %v48
    %v71 = vpop.permute.xlu0 %70
    %74 = vset.pattern.permute.xlu0 0
    %75 = vperm.xlu0 %74, %v49
    %v76 = vpop.permute.xlu0 %75
    %79 = vset.pattern.permute.xlu0 0
    %80 = vperm.xlu0 %79, %v50
    %v81 = vpop.permute.xlu0 %80
    %84 = vset.pattern.permute.xlu0 0
    %85 = vperm.xlu0 %84, %v51
    %v86 = vpop.permute.xlu0 %85
    %89 = vset.pattern.permute.xlu0 0
    %90 = vperm.xlu0 %89, %v52
    %v91 = vpop.permute.xlu0 %90
    %94 = vset.pattern.permute.xlu0 0
    %95 = vperm.xlu0 %94, %v53
    %v96 = vpop.permute.xlu0 %95
    %99 = vset.pattern.permute.xlu0 0
    %100 = vperm.xlu0 %99, %v54
    %v101 = vpop.permute.xlu0 %100
    %104 = vset.pattern.permute.xlu0 0
    %105 = vperm.xlu0 %104, %v55
    %v106 = vpop.permute.xlu0 %105
    %109 = vset.pattern.permute.xlu0 0
    %110 = vperm.xlu0 %109, %v56
    %v111 = vpop.permute.xlu0 %110
    %114 = vset.pattern.permute.xlu0 0
    %115 = vperm.xlu0 %114, %v57
    %v116 = vpop.permute.xlu0 %115
    %119 = vset.pattern.permute.xlu0 0
    %120 = vperm.xlu0 %119, %v58
    %v121 = vpop.permute.xlu0 %120
    %124 = vset.pattern.permute.xlu0 0
    %125 = vperm.xlu0 %124, %v59
    %v126 = vpop.permute.xlu0 %125
    %129 = vset.pattern.permute.xlu0 0
    %130 = vperm.xlu0 %129, %v60
    %v131 = vpop.permute.xlu0 %130
    %134 = vset.pattern.permute.xlu0 0
    %135 = vperm.xlu0 %134, %v61
    %v136 = vpop.permute.xlu0 %135
    %139 = vset.pattern.permute.xlu0 0
    %140 = vperm.xlu0 %139, %v62
    %v141 = vpop.permute.xlu0 %140
    %v159 = vunpack.c.l.b16 %v31
    %v160 = vunpack.c.l.b16 %v32
    %v161 = vunpack.c.l.b16 %v33
    %v162 = vunpack.c.l.b16 %v34
    %v163 = vunpack.c.l.b16 %v35
    %v164 = vunpack.c.l.b16 %v36
    %v165 = vunpack.c.l.b16 %v37
    %v166 = vunpack.c.l.b16 %v38
    %v167 = vunpack.c.l.b16 %v39
    %v168 = vunpack.c.l.b16 %v40
    %v169 = vunpack.c.l.b16 %v41
    %v170 = vunpack.c.l.b16 %v42
    %v171 = vunpack.c.l.b16 %v43
    %v172 = vunpack.c.l.b16 %v44
    %v173 = vunpack.c.l.b16 %v45
    %v174 = vunpack.c.l.b16 %v46
    %v175 = vpack.c.b16 %v160, %v159
    %v176 = vpack.c.b16 %v162, %v161
    %v177 = vpack.c.b16 %v164, %v163
    %v178 = vpack.c.b16 %v166, %v165
    %v179 = vpack.c.b16 %v168, %v167
    %v180 = vpack.c.b16 %v170, %v169
    %v181 = vpack.c.b16 %v172, %v171
    %v182 = vpack.c.b16 %v174, %v173
    %vm183 = vcmask 64512
    %v185 = vsel %vm183, %v175, 0
    %v188 = vsel %vm183, %v176, 0
    %v191 = vsel %vm183, %v177, 0
    %v194 = vsel %vm183, %v178, 0
    %v197 = vsel %vm183, %v179, 0
    %v200 = vsel %vm183, %v180, 0
    %v203 = vsel %vm183, %v181, 0
    %v206 = vsel %vm183, %v182, 0
    %vm208 = vcmask 1043456
    %v210 = vsel %vm208, %v30, 0
    %212 = vmatpush.bf16.msra.mxu0 0
    %213 = vmatpush.bf16.msra.mxu0 0
    %214 = vmatpush.bf16.msra.mxu0 0
    %215 = vmatpush.bf16.msra.mxu0 0
    %216 = vmatpush.bf16.msra.mxu0 0
    %217 = vmatpush.bf16.msra.mxu0 0
    %218 = vmatpush.bf16.msra.mxu0 0
    %219 = vmatpush.bf16.msra.mxu0 %v210
    %220 = vmatmul.bf16.gmra.mxu0 %v185
    %v221 = vpop.f32.mrf.mxu0
    %v222 = vadd.f32 %v66, %v221
    %v223 = vpop.f32.mrf.mxu0
    %v224 = vadd.f32 %v71, %v223
    %225 = vmatmul.bf16.gmra.mxu0 %v188
    %v226 = vpop.f32.mrf.mxu0
    %v227 = vadd.f32 %v76, %v226
    %v228 = vpop.f32.mrf.mxu0
    %v229 = vadd.f32 %v81, %v228
    %230 = vmatmul.bf16.gmra.mxu0 %v191
    %v231 = vpop.f32.mrf.mxu0
    %v232 = vadd.f32 %v86, %v231
    %v233 = vpop.f32.mrf.mxu0
    %v234 = vadd.f32 %v91, %v233
    %235 = vmatmul.bf16.gmra.mxu0 %v194
    %v236 = vpop.f32.mrf.mxu0
    %v237 = vadd.f32 %v96, %v236
    %v238 = vpop.f32.mrf.mxu0
    %v239 = vadd.f32 %v101, %v238
    %240 = vmatmul.bf16.gmra.mxu0 %v197
    %v241 = vpop.f32.mrf.mxu0
    %v242 = vadd.f32 %v106, %v241
    %v243 = vpop.f32.mrf.mxu0
    %v244 = vadd.f32 %v111, %v243
    %245 = vmatmul.bf16.gmra.mxu0 %v200
    %v246 = vpop.f32.mrf.mxu0
    %v247 = vadd.f32 %v116, %v246
    %v248 = vpop.f32.mrf.mxu0
    %v249 = vadd.f32 %v121, %v248
    %250 = vmatmul.bf16.gmra.mxu0 %v203
    %v251 = vpop.f32.mrf.mxu0
    %v252 = vadd.f32 %v126, %v251
    %v253 = vpop.f32.mrf.mxu0
    %v254 = vadd.f32 %v131, %v253
    %255 = vmatmul.bf16.gmra.mxu0 %v206
    %v256 = vpop.f32.mrf.mxu0
    %v257 = vadd.f32 %v136, %v256
    %v258 = vpop.f32.mrf.mxu0
    %v259 = vadd.f32 %v141, %v258
    %260 = vdwg.mxu0
    %v261 = vmax.f32 %v222, 0.0
    %v262 = vmax.f32 %v224, 0.0
    %v263 = vmax.f32 %v227, 0.0
    %v264 = vmax.f32 %v229, 0.0
    %v265 = vmax.f32 %v232, 0.0
    %v266 = vmax.f32 %v234, 0.0
    %v267 = vmax.f32 %v237, 0.0
    %v268 = vmax.f32 %v239, 0.0
    %v269 = vmax.f32 %v242, 0.0
    %v270 = vmax.f32 %v244, 0.0
    %v271 = vmax.f32 %v247, 0.0
    %v272 = vmax.f32 %v249, 0.0
    %v273 = vmax.f32 %v252, 0.0
    %v274 = vmax.f32 %v254, 0.0
    %v275 = vmax.f32 %v257, 0.0
    %v276 = vmax.f32 %v259, 0.0
    %v277 = vld [vmem:[%s3] sm:$0xf]
    %v278 = vld [vmem:[%s3 + $0x4] sm:$0xf]
    %v279 = vld [vmem:[%s3 + $0x8] sm:$0xf]
    %v280 = vld [vmem:[%s3 + $0xc] sm:$0xf]
    %v281 = vld [vmem:[%s3 + $0x10] sm:$0xf]
    %v282 = vld [vmem:[%s3 + $0x14] sm:$0xf]
    %v283 = vld [vmem:[%s3 + $0x18] sm:$0xf]
    %v284 = vld [vmem:[%s3 + $0x1c] sm:$0xf]
    %v285 = vld [vmem:[%s3 + $0x20] sm:$0xf]
    %v286 = vld [vmem:[%s3 + $0x24] sm:$0xf]
    %v287 = vld [vmem:[%s3 + $0x28] sm:$0xf]
    %v288 = vld [vmem:[%s3 + $0x2c] sm:$0xf]
    %v289 = vld [vmem:[%s3 + $0x30] sm:$0xf]
    %v290 = vld [vmem:[%s3 + $0x34] sm:$0xf]
    %v291 = vld [vmem:[%s3 + $0x38] sm:$0xf]
    %v292 = vld [vmem:[%s3 + $0x3c] sm:$0xf]
    %v293 = vpack.c.bf16 %v262, %v261
    %v294 = vpack.c.bf16 %v264, %v263
    %v295 = vpack.c.bf16 %v266, %v265
    %v296 = vpack.c.bf16 %v268, %v267
    %v297 = vpack.c.bf16 %v270, %v269
    %v298 = vpack.c.bf16 %v272, %v271
    %v299 = vpack.c.bf16 %v274, %v273
    %v300 = vpack.c.bf16 %v276, %v275
    %v301 = vld [vmem:[%s4] sm:$0xff]
    %v302 = vld [vmem:[%s4 + $0x8] sm:$0xff]
    %v303 = vld [vmem:[%s4 + $0x10] sm:$0xff]
    %v304 = vld [vmem:[%s4 + $0x18] sm:$0xff]
    %v305 = vld [vmem:[%s4 + $0x20] sm:$0xff]
    %v306 = vld [vmem:[%s4 + $0x28] sm:$0xff]
    %v307 = vld [vmem:[%s4 + $0x30] sm:$0xff]
    %v308 = vld [vmem:[%s4 + $0x38] sm:$0xff]
    %v309 = vld [vmem:[%s4 + $0x40] sm:$0xff]
    %v310 = vld [vmem:[%s4 + $0x48] sm:$0xff]
    %v311 = vld [vmem:[%s4 + $0x50] sm:$0xff]
    %v312 = vld [vmem:[%s4 + $0x58] sm:$0xff]
    %v313 = vld [vmem:[%s4 + $0x60] sm:$0xff]
    %v314 = vld [vmem:[%s4 + $0x68] sm:$0xff]
    %v315 = vld [vmem:[%s4 + $0x70] sm:$0xff]
    %v316 = vld [vmem:[%s4 + $0x78] sm:$0xff]
    %318 = vset.pattern.permute.xlu0 0
    %319 = vperm.xlu0 %318, %v301
    %v320 = vpop.permute.xlu0 %319
    %323 = vset.pattern.permute.xlu0 0
    %324 = vperm.xlu0 %323, %v302
    %v325 = vpop.permute.xlu0 %324
    %328 = vset.pattern.permute.xlu0 0
    %329 = vperm.xlu0 %328, %v303
    %v330 = vpop.permute.xlu0 %329
    %333 = vset.pattern.permute.xlu0 0
    %334 = vperm.xlu0 %333, %v304
    %v335 = vpop.permute.xlu0 %334
    %338 = vset.pattern.permute.xlu0 0
    %339 = vperm.xlu0 %338, %v305
    %v340 = vpop.permute.xlu0 %339
    %343 = vset.pattern.permute.xlu0 0
    %344 = vperm.xlu0 %343, %v306
    %v345 = vpop.permute.xlu0 %344
    %348 = vset.pattern.permute.xlu0 0
    %349 = vperm.xlu0 %348, %v307
    %v350 = vpop.permute.xlu0 %349
    %353 = vset.pattern.permute.xlu0 0
    %354 = vperm.xlu0 %353, %v308
    %v355 = vpop.permute.xlu0 %354
    %358 = vset.pattern.permute.xlu0 0
    %359 = vperm.xlu0 %358, %v309
    %v360 = vpop.permute.xlu0 %359
    %363 = vset.pattern.permute.xlu0 0
    %364 = vperm.xlu0 %363, %v310
    %v365 = vpop.permute.xlu0 %364
    %368 = vset.pattern.permute.xlu0 0
    %369 = vperm.xlu0 %368, %v311
    %v370 = vpop.permute.xlu0 %369
    %373 = vset.pattern.permute.xlu0 0
    %374 = vperm.xlu0 %373, %v312
    %v375 = vpop.permute.xlu0 %374
    %378 = vset.pattern.permute.xlu0 0
    %379 = vperm.xlu0 %378, %v313
    %v380 = vpop.permute.xlu0 %379
    %383 = vset.pattern.permute.xlu0 0
    %384 = vperm.xlu0 %383, %v314
    %v385 = vpop.permute.xlu0 %384
    %388 = vset.pattern.permute.xlu0 0
    %389 = vperm.xlu0 %388, %v315
    %v390 = vpop.permute.xlu0 %389
    %393 = vset.pattern.permute.xlu0 0
    %394 = vperm.xlu0 %393, %v316
    %v395 = vpop.permute.xlu0 %394
    %v413 = vunpack.c.l.b16 %v277
    %v414 = vunpack.c.l.b16 %v278
    %v415 = vunpack.c.l.b16 %v279
    %v416 = vunpack.c.l.b16 %v280
    %v417 = vunpack.c.l.b16 %v281
    %v418 = vunpack.c.l.b16 %v282
    %v419 = vunpack.c.l.b16 %v283
    %v420 = vunpack.c.l.b16 %v284
    %v421 = vunpack.c.l.b16 %v285
    %v422 = vunpack.c.l.b16 %v286
    %v423 = vunpack.c.l.b16 %v287
    %v424 = vunpack.c.l.b16 %v288
    %v425 = vunpack.c.l.b16 %v289
    %v426 = vunpack.c.l.b16 %v290
    %v427 = vunpack.c.l.b16 %v291
    %v428 = vunpack.c.l.b16 %v292
    %v429 = vpack.c.b16 %v414, %v413
    %v430 = vpack.c.b16 %v416, %v415
    %v431 = vpack.c.b16 %v418, %v417
    %v432 = vpack.c.b16 %v420, %v419
    %v433 = vpack.c.b16 %v422, %v421
    %v434 = vpack.c.b16 %v424, %v423
    %v435 = vpack.c.b16 %v426, %v425
    %v436 = vpack.c.b16 %v428, %v427
    %445 = vmatpush.bf16.msra.mxu0 %v300
    %446 = vmatpush.bf16.msra.mxu0 %v299
    %447 = vmatpush.bf16.msra.mxu0 %v298
    %448 = vmatpush.bf16.msra.mxu0 %v297
    %449 = vmatpush.bf16.msra.mxu0 %v296
    %450 = vmatpush.bf16.msra.mxu0 %v295
    %451 = vmatpush.bf16.msra.mxu0 %v294
    %452 = vmatpush.bf16.msra.mxu0 %v293
    %453 = vmatmul.bf16.gmra.mxu0 %v429
    %v454 = vpop.f32.mrf.mxu0
    %v455 = vadd.f32 %v320, %v454
    %v456 = vpop.f32.mrf.mxu0
    %v457 = vadd.f32 %v325, %v456
    %458 = vmatmul.bf16.gmra.mxu0 %v430
    %v459 = vpop.f32.mrf.mxu0
    %v460 = vadd.f32 %v330, %v459
    %v461 = vpop.f32.mrf.mxu0
    %v462 = vadd.f32 %v335, %v461
    %463 = vmatmul.bf16.gmra.mxu0 %v431
    %v464 = vpop.f32.mrf.mxu0
    %v465 = vadd.f32 %v340, %v464
    %v466 = vpop.f32.mrf.mxu0
    %v467 = vadd.f32 %v345, %v466
    %468 = vmatmul.bf16.gmra.mxu0 %v432
    %v469 = vpop.f32.mrf.mxu0
    %v470 = vadd.f32 %v350, %v469
    %v471 = vpop.f32.mrf.mxu0
    %v472 = vadd.f32 %v355, %v471
    %473 = vmatmul.bf16.gmra.mxu0 %v433
    %v474 = vpop.f32.mrf.mxu0
    %v475 = vadd.f32 %v360, %v474
    %v476 = vpop.f32.mrf.mxu0
    %v477 = vadd.f32 %v365, %v476
    %478 = vmatmul.bf16.gmra.mxu0 %v434
    %v479 = vpop.f32.mrf.mxu0
    %v480 = vadd.f32 %v370, %v479
    %v481 = vpop.f32.mrf.mxu0
    %v482 = vadd.f32 %v375, %v481
    %483 = vmatmul.bf16.gmra.mxu0 %v435
    %v484 = vpop.f32.mrf.mxu0
    %v485 = vadd.f32 %v380, %v484
    %v486 = vpop.f32.mrf.mxu0
    %v487 = vadd.f32 %v385, %v486
    %488 = vmatmul.bf16.gmra.mxu0 %v436
    %v489 = vpop.f32.mrf.mxu0
    %v490 = vadd.f32 %v390, %v489
    %v491 = vpop.f32.mrf.mxu0
    %v492 = vadd.f32 %v395, %v491
    %493 = vdwg.mxu0
    %v494 = vmax.f32 %v455, 0.0
    %v495 = vmax.f32 %v457, 0.0
    %v496 = vmax.f32 %v460, 0.0
    %v497 = vmax.f32 %v462, 0.0
    %v498 = vmax.f32 %v465, 0.0
    %v499 = vmax.f32 %v467, 0.0
    %v500 = vmax.f32 %v470, 0.0
    %v501 = vmax.f32 %v472, 0.0
    %v502 = vmax.f32 %v475, 0.0
    %v503 = vmax.f32 %v477, 0.0
    %v504 = vmax.f32 %v480, 0.0
    %v505 = vmax.f32 %v482, 0.0
    %v506 = vmax.f32 %v485, 0.0
    %v507 = vmax.f32 %v487, 0.0
    %v508 = vmax.f32 %v490, 0.0
    %v509 = vmax.f32 %v492, 0.0
    %v510 = vld [vmem:[%s5] sm:$0xff]
    %v511 = vld [vmem:[%s5 + $0x8] sm:$0xff]
    %v512 = vld [vmem:[%s5 + $0x10] sm:$0xff]
    %v513 = vld [vmem:[%s5 + $0x18] sm:$0xff]
    %v514 = vld [vmem:[%s5 + $0x20] sm:$0xff]
    %v515 = vld [vmem:[%s5 + $0x28] sm:$0xff]
    %v516 = vld [vmem:[%s5 + $0x30] sm:$0xff]
    %v517 = vld [vmem:[%s5 + $0x38] sm:$0xff]
    %v518 = vld [vmem:[%s5 + $0x40] sm:$0xff]
    %v519 = vld [vmem:[%s5 + $0x48] sm:$0xff]
    %v520 = vld [vmem:[%s5 + $0x50] sm:$0xff]
    %v521 = vld [vmem:[%s5 + $0x58] sm:$0xff]
    %v522 = vld [vmem:[%s5 + $0x60] sm:$0xff]
    %v523 = vld [vmem:[%s5 + $0x68] sm:$0xff]
    %v524 = vld [vmem:[%s5 + $0x70] sm:$0xff]
    %v525 = vld [vmem:[%s5 + $0x78] sm:$0xff]
    %527 = vset.pattern.permute.xlu0 0
    %528 = vperm.xlu0 %527, %v510
    %v529 = vpop.permute.xlu0 %528
    %532 = vset.pattern.permute.xlu0 0
    %533 = vperm.xlu0 %532, %v511
    %v534 = vpop.permute.xlu0 %533
    %537 = vset.pattern.permute.xlu0 0
    %538 = vperm.xlu0 %537, %v512
    %v539 = vpop.permute.xlu0 %538
    %542 = vset.pattern.permute.xlu0 0
    %543 = vperm.xlu0 %542, %v513
    %v544 = vpop.permute.xlu0 %543
    %547 = vset.pattern.permute.xlu0 0
    %548 = vperm.xlu0 %547, %v514
    %v549 = vpop.permute.xlu0 %548
    %552 = vset.pattern.permute.xlu0 0
    %553 = vperm.xlu0 %552, %v515
    %v554 = vpop.permute.xlu0 %553
    %557 = vset.pattern.permute.xlu0 0
    %558 = vperm.xlu0 %557, %v516
    %v559 = vpop.permute.xlu0 %558
    %562 = vset.pattern.permute.xlu0 0
    %563 = vperm.xlu0 %562, %v517
    %v564 = vpop.permute.xlu0 %563
    %567 = vset.pattern.permute.xlu0 0
    %568 = vperm.xlu0 %567, %v518
    %v569 = vpop.permute.xlu0 %568
    %572 = vset.pattern.permute.xlu0 0
    %573 = vperm.xlu0 %572, %v519
    %v574 = vpop.permute.xlu0 %573
    %577 = vset.pattern.permute.xlu0 0
    %578 = vperm.xlu0 %577, %v520
    %v579 = vpop.permute.xlu0 %578
    %582 = vset.pattern.permute.xlu0 0
    %583 = vperm.xlu0 %582, %v521
    %v584 = vpop.permute.xlu0 %583
    %587 = vset.pattern.permute.xlu0 0
    %588 = vperm.xlu0 %587, %v522
    %v589 = vpop.permute.xlu0 %588
    %592 = vset.pattern.permute.xlu0 0
    %593 = vperm.xlu0 %592, %v523
    %v594 = vpop.permute.xlu0 %593
    %597 = vset.pattern.permute.xlu0 0
    %598 = vperm.xlu0 %597, %v524
    %v599 = vpop.permute.xlu0 %598
    %602 = vset.pattern.permute.xlu0 0
    %603 = vperm.xlu0 %602, %v525
    %v604 = vpop.permute.xlu0 %603
    %v606 = vmul.f32 %v494, %v529
    %v607 = vmul.f32 %v495, %v534
    %v608 = vmul.f32 %v496, %v539
    %v609 = vmul.f32 %v497, %v544
    %v610 = vmul.f32 %v498, %v549
    %v611 = vmul.f32 %v499, %v554
    %v612 = vmul.f32 %v500, %v559
    %v613 = vmul.f32 %v501, %v564
    %v614 = vmul.f32 %v502, %v569
    %v615 = vmul.f32 %v503, %v574
    %v616 = vmul.f32 %v504, %v579
    %v617 = vmul.f32 %v505, %v584
    %v618 = vmul.f32 %v506, %v589
    %v619 = vmul.f32 %v507, %v594
    %v620 = vmul.f32 %v508, %v599
    %v621 = vmul.f32 %v509, %v604
    %v622 = vadd.f32 %v606, %v607
    %v623 = vadd.f32 %v622, %v608
    %v624 = vadd.f32 %v623, %v609
    %v625 = vadd.f32 %v624, %v610
    %v626 = vadd.f32 %v625, %v611
    %v627 = vadd.f32 %v626, %v612
    %v628 = vadd.f32 %v627, %v613
    %v629 = vadd.f32 %v628, %v614
    %v630 = vadd.f32 %v629, %v615
    %v631 = vadd.f32 %v630, %v616
    %v632 = vadd.f32 %v631, %v617
    %v633 = vadd.f32 %v632, %v618
    %v634 = vadd.f32 %v633, %v619
    %v635 = vadd.f32 %v634, %v620
    %v636 = vadd.f32 %v635, %v621
    %v637 = vrot.slane %v636, 4
    %v638 = vadd.f32 %v636, %v637
    %v639 = vrot.slane %v638, 2
    %v640 = vadd.f32 %v638, %v639
    %v641 = vrot.slane %v640, 1
    %v642 = vadd.f32 %v640, %v641
    %s643 = sld [smem:[#allocation2]]
    %v644 = vstv %s643
    %v645 = vadd.f32 %v642, %v644
    %646 = vst [vmem:[#allocation3] sm:$0x1] %v645
    // Predicated region
    $region30: #{tpu_custom_call.1} parent=1 // pred_check
      _
    $region31: #{tpu_custom_call.1} parent=1 // pred_check_branch
      %648 = sbr.rel (0) target = $region33
    $region32: #{tpu_custom_call.1} parent=1 // pred_region
      %650 = vsyncadd [#allocation4], 0
      %s652 = sshll.u32 [#allocation3], 4
      %s653 = int_to_ptr.vmem [resolvable:$true] %s652
      %s654 = sshll.u32 %s7, 4
      %s655 = int_to_ptr.hbm [resolvable:$true] %s654
      %657 = dma.vmem_to_hbm [thread:$0]  %s653, 16, %s655, [#allocation4]
    $region33: #{tpu_custom_call.1} parent=1 // pred_fallthru
      _
    // Predicated region
    $region34: #{tpu_custom_call.1} parent=1 // pred_check
      _
    $region35: #{tpu_custom_call.1} parent=1 // pred_check_branch
      %659 = sbr.rel (0) target = $region37
    $region36: #{tpu_custom_call.1} parent=1 // pred_region
      %661 = dma.done [#allocation4], 16
    $region37: #{tpu_custom_call.1} parent=1 // pred_fallthru
      _
    %662 = vsyncpa [#allocation4], 1

</llo_original>
